<compile_context>
chip_gen: v5e
topology: v5e:2x2
jax: 0.10.0
libtpu: 0.0.40
codegen_flags: <defaults>
</compile_context>

<pallas_src>
from functools import partial

import jax
import jax.numpy as jnp
from jax import lax
from jax.experimental import pallas as pl
from jax.experimental.pallas import tpu as pltpu


def _round_up(n, m):
    return ((n + m - 1) // m) * m


def _supports_bf16_eup():
    """v6e / v7x have a bf16 VPU/EUP path; v5e does not (keep tanh in f32)."""
    try:
        kind = jax.devices()[0].device_kind.lower()
    except Exception:
        return True
    return "v5" not in kind


def value_mlp_kernel(x_ref, w1_ref, b1_ref, w2_ref, b2_ref, w3_ref, b3_ref, o_ref,
                     *, bf16_tanh):
    # x tile in native (TM, S) layout; cast to bf16 for the MXU in-kernel.
    x = x_ref[...].astype(jnp.bfloat16)                                   # (TM, S)

    # Layer 1: contract the shared state_dim axis -> (H1, TM), f32 accumulate.
    acc1 = lax.dot_general(
        w1_ref[...], x, (((1,), (1,)), ((), ())),
        preferred_element_type=jnp.float32,
    ) + b1_ref[...]
    if bf16_tanh:
        h1 = jnp.tanh(acc1.astype(jnp.bfloat16))        # bf16 EUP path (v6e/v7x)
    else:
        h1 = jnp.tanh(acc1).astype(jnp.bfloat16)        # f32 tanh (v5e), cast for MXU

    # Layer 2: (H2, H1) @ (H1, TM) -> (H2, TM), f32 accumulate.
    acc2 = jnp.dot(w2_ref[...], h1, preferred_element_type=jnp.float32) + b2_ref[...]
    if bf16_tanh:
        h2 = jnp.tanh(acc2.astype(jnp.bfloat16))
    else:
        h2 = jnp.tanh(acc2)

    # Value head (out_features = 1): VPU multiply + sublane reduce -> (1, TM),
    # lane-major so the store is an unmasked, lane-dense vst.  (MXU is nearly
    # idle here, but the VPU/XLU slots have slack — keep the cheap form.)
    v = jnp.sum(h2.astype(jnp.float32) * w3_ref[...], axis=0, keepdims=True) + b3_ref[...]
    o_ref[...] = v.astype(o_ref.dtype)


def value_forward(x, params, *, tile_m=None, bf16_tanh=None):
    """Forward pass of the Value MLP.

    x: (B, state_dim) float32, row-major (same layout as the PyTorch module input).
    params: dict with
        w1t: (H1, state_dim) bf16   (PyTorch nn.Linear weight layout: (out, in))
        b1 : (H1, 1)        f32
        w2t: (H2, H1)       bf16
        b2 : (H2, 1)        f32
        w3 : (H2, 1)        f32     (value head weight, already scaled by 0.1)
        b3 : (1, 1)         f32     (value head bias, zero)
    Returns: (B, 1) float32.

    tile_m: batch tile (multiple of 128).  Defaults to min(round_up(B,128), 4096)
            so small batches use a single tile and large batches amortize the
            per-grid-step fixed cost while staying far below the VMEM ceiling
            on every generation (v5e/v6e 128 MiB, v7x 64 MiB).
    """
    w1t, b1 = params["w1t"], params["b1"]
    w2t, b2 = params["w2t"], params["b2"]
    w3, b3 = params["w3"], params["b3"]

    B, state_dim = x.shape
    h1 = w1t.shape[0]
    h2 = w2t.shape[0]

    if bf16_tanh is None:
        bf16_tanh = _supports_bf16_eup()

    if tile_m is None:
        tile_m = max(128, min(_round_up(B, 128), 4096))
    assert tile_m > 0 and tile_m % 128 == 0, (
        f"tile_m must be a positive multiple of 128, got {tile_m}")

    num_tiles = pl.cdiv(B, tile_m)
    b_pad = num_tiles * tile_m

    # Only pad when the batch is not already a tile multiple (no transpose, no cast).
    x_in = x if b_pad == B else jnp.pad(x, ((0, b_pad - B), (0, 0)))

    resident = lambda shape: pl.BlockSpec(shape, lambda i: (0,) * len(shape))

    # Scheduler hint: two small matmuls + 2*(H1+H2)/2 tanh per row, x read + scalar out.
    weight_bytes = 2 * (h1 * state_dim + h2 * h1) + 4 * (h1 + h2 + h2 + 1)
    cost = pl.CostEstimate(
        flops=2 * b_pad * (state_dim * h1 + h1 * h2 + h2),
        transcendentals=b_pad * (h1 + h2),
        bytes_accessed=4 * state_dim * b_pad + 4 * b_pad + weight_bytes,
    )

    out = pl.pallas_call(
        partial(value_mlp_kernel, bf16_tanh=bf16_tanh),
        grid=(num_tiles,),
        in_specs=[
            # x streams in native (B, S) layout along the batch (double-buffered).
            pl.BlockSpec((tile_m, state_dim), lambda i: (i, 0)),
            # Weights / biases: constant index_map -> DMA'd once, VMEM-resident.
            resident((h1, state_dim)),
            resident((h1, 1)),
            resident((h2, h1)),
            resident((h2, 1)),
            resident((h2, 1)),
            resident((1, 1)),
        ],
        out_specs=pl.BlockSpec((1, tile_m), lambda i: (0, i)),
        out_shape=jax.ShapeDtypeStruct((1, b_pad), jnp.float32),
        compiler_params=pltpu.CompilerParams(
            dimension_semantics=("parallel",),  # megacore sharding on v7x
        ),
        cost_estimate=cost,
    )(x_in, w1t, b1, w2t, b2, w3, b3)

    return out[0, :B].reshape(B, 1)


def init_value_params(key, state_dim, hidden_size=(128, 128)):
    """Mimics PyTorch nn.Linear defaults: U(-1/sqrt(fan_in), 1/sqrt(fan_in)) for
    weights and biases, value_head.weight *= 0.1, value_head.bias = 0.
    Weights use the PyTorch (out_features, in_features) layout; hidden-layer
    weights are bf16 (MXU fast path), biases / head stay f32."""
    assert len(hidden_size) == 2, "kernel is specialized to two hidden layers"
    h1, h2 = hidden_size
    k = jax.random.split(key, 5)

    def unif(kk, shape, fan_in):
        bound = 1.0 / (float(fan_in) ** 0.5)
        return jax.random.uniform(kk, shape, jnp.float32, -bound, bound)

    return {
        "w1t": unif(k[0], (h1, state_dim), state_dim).astype(jnp.bfloat16),
        "b1": unif(k[1], (h1, 1), state_dim),
        "w2t": unif(k[2], (h2, h1), h1).astype(jnp.bfloat16),
        "b2": unif(k[3], (h2, 1), h1),
        "w3": unif(k[4], (h2, 1), h2) * 0.1,
        "b3": jnp.zeros((1, 1), jnp.float32),
    }


def value_reference(x, params, *, bf16_tanh):
    """Pure-JAX reference with the SAME bf16-input / f32-accumulate math as the
    kernel (used for tight-tolerance correctness checking)."""
    xt = jnp.transpose(x).astype(jnp.bfloat16)  # (S, B)
    acc1 = jnp.dot(params["w1t"], xt, preferred_element_type=jnp.float32) + params["b1"]
    h1 = (jnp.tanh(acc1.astype(jnp.bfloat16)) if bf16_tanh
          else jnp.tanh(acc1).astype(jnp.bfloat16))
    acc2 = jnp.dot(params["w2t"], h1, preferred_element_type=jnp.float32) + params["b2"]
    h2 = jnp.tanh(acc2.astype(jnp.bfloat16)) if bf16_tanh else jnp.tanh(acc2)
    v = jnp.sum(h2.astype(jnp.float32) * params["w3"], axis=0, keepdims=True) + params["b3"]
    return jnp.transpose(v)  # (B, 1)


def value_reference_f32(x, params):
    """Full-f32 reference matching the original PyTorch module's math."""
    w1 = params["w1t"].astype(jnp.float32)
    w2 = params["w2t"].astype(jnp.float32)
    h = jnp.tanh(x @ w1.T + params["b1"].T)
    h = jnp.tanh(h @ w2.T + params["b2"].T)
    return h @ params["w3"] + params["b3"]


if __name__ == "__main__":
    key = jax.random.PRNGKey(0)
    k_param, k_x1, k_x2 = jax.random.split(key, 3)

    state_dim = 32
    params = init_value_params(k_param, state_dim, hidden_size=(128, 128))
    bf16_tanh = _supports_bf16_eup()

    # Small demo batch: single grid tile (exercises batch padding + default tile_m).
    x_small = jax.random.normal(k_x1, (8, state_dim), dtype=jnp.float32)
    out_small = jax.block_until_ready(value_forward(x_small, params))
    assert out_small.shape == (8, 1), out_small.shape
    ref_small = value_reference(x_small, params, bf16_tanh=bf16_tanh)
    assert jnp.allclose(out_small, ref_small, atol=1e-3, rtol=1e-3)
    # Sanity vs. the full-f32 (PyTorch-equivalent) math; loose tol for bf16 inputs.
    ref_small_f32 = value_reference_f32(x_small, params)
    assert jnp.allclose(out_small, ref_small_f32, atol=1e-2, rtol=1e-1)

    # Multi-tile batch: grid=(3,) "parallel" steps, non-multiple batch -> padding.
    x_big = jax.random.normal(k_x2, (600, state_dim), dtype=jnp.float32)
    out_big = jax.block_until_ready(value_forward(x_big, params, tile_m=256))
    assert out_big.shape == (600, 1), out_big.shape
    ref_big = value_reference(x_big, params, bf16_tanh=bf16_tanh)
    assert jnp.allclose(out_big, ref_big, atol=1e-3, rtol=1e-3)

    # Also exercise the f32-tanh (v5e-style) code path explicitly.
    out_f32tanh = jax.block_until_ready(
        value_forward(x_big, params, tile_m=256, bf16_tanh=False))
    ref_f32tanh = value_reference(x_big, params, bf16_tanh=False)
    assert jnp.allclose(out_f32tanh, ref_f32tanh, atol=1e-3, rtol=1e-3)

    print("KERNEL_OK")
</pallas_src>

<mosaic_0001>
module attributes {stable_mosaic.version = 11 : i64} {
  func.func @value_mlp_kernel(%arg0: i32, %arg1: memref<128x32xf32, #tpu.memory_space<vmem>>, %arg2: memref<128x32xbf16, #tpu.memory_space<vmem>>, %arg3: memref<128x1xf32, #tpu.memory_space<vmem>>, %arg4: memref<128x128xbf16, #tpu.memory_space<vmem>>, %arg5: memref<128x1xf32, #tpu.memory_space<vmem>>, %arg6: memref<128x1xf32, #tpu.memory_space<vmem>>, %arg7: memref<1x1xf32, #tpu.memory_space<vmem>>, %arg8: memref<1x128xf32, #tpu.memory_space<vmem>>) attributes {dimension_semantics = [#tpu.dimension_semantics<parallel>], iteration_bounds = array<i64: 1>, scalar_prefetch = 0 : i64, scratch_operands = 0 : i64, tpu.core_type = #tpu.core_type<tc>, window_params = [{transform_indices = @transform_0, window_bounds = array<i64: 128, 32>}, {pipeline_mode = #tpu.pipeline_mode<synchronous>, transform_indices = @transform_1, window_bounds = array<i64: 128, 32>}, {pipeline_mode = #tpu.pipeline_mode<synchronous>, transform_indices = @transform_2, window_bounds = array<i64: 128, 1>}, {pipeline_mode = #tpu.pipeline_mode<synchronous>, transform_indices = @transform_3, window_bounds = array<i64: 128, 128>}, {pipeline_mode = #tpu.pipeline_mode<synchronous>, transform_indices = @transform_4, window_bounds = array<i64: 128, 1>}, {pipeline_mode = #tpu.pipeline_mode<synchronous>, transform_indices = @transform_5, window_bounds = array<i64: 128, 1>}, {pipeline_mode = #tpu.pipeline_mode<synchronous>, transform_indices = @transform_6, window_bounds = array<i64: 1, 1>}, {transform_indices = @transform_7, window_bounds = array<i64: 1, 128>}]} {
    %c0 = arith.constant 0 : index
    %c0_0 = arith.constant 0 : index
    %0 = vector.load %arg1[%c0, %c0_0] : memref<128x32xf32, #tpu.memory_space<vmem>>, vector<128x32xf32>
    %1 = arith.truncf %0 : vector<128x32xf32> to vector<128x32xbf16>
    %c0_1 = arith.constant 0 : index
    %c0_2 = arith.constant 0 : index
    %2 = vector.load %arg2[%c0_1, %c0_2] : memref<128x32xbf16, #tpu.memory_space<vmem>>, vector<128x32xbf16>
    %cst = arith.constant dense<0.000000e+00> : vector<128x128xf32>
    %3 = tpu.matmul %2, %1, %cst {dimension_numbers = #tpu.dot_dimension_numbers<[1], [1], [0], [0], [0, 0, 1, 0], [], []>} : vector<128x32xbf16>, vector<128x32xbf16>, vector<128x128xf32> -> vector<128x128xf32>
    %c0_3 = arith.constant 0 : index
    %c0_4 = arith.constant 0 : index
    %4 = vector.load %arg3[%c0_3, %c0_4] : memref<128x1xf32, #tpu.memory_space<vmem>>, vector<128x1xf32>
    %5 = vector.broadcast %4 : vector<128x1xf32> to vector<128x128xf32>
    %6 = arith.addf %3, %5 : vector<128x128xf32>
    %7 = arith.truncf %6 : vector<128x128xf32> to vector<128x128xbf16>
    %8 = math.tanh %7 : vector<128x128xbf16>
    %c0_5 = arith.constant 0 : index
    %c0_6 = arith.constant 0 : index
    %9 = vector.load %arg4[%c0_5, %c0_6] : memref<128x128xbf16, #tpu.memory_space<vmem>>, vector<128x128xbf16>
    %cst_7 = arith.constant dense<0.000000e+00> : vector<128x128xf32>
    %10 = tpu.matmul %9, %8, %cst_7 {dimension_numbers = #tpu.dot_dimension_numbers<[1], [0], [0], [1], [0, 0, 1, 1], [], []>} : vector<128x128xbf16>, vector<128x128xbf16>, vector<128x128xf32> -> vector<128x128xf32>
    %c0_8 = arith.constant 0 : index
    %c0_9 = arith.constant 0 : index
    %11 = vector.load %arg5[%c0_8, %c0_9] : memref<128x1xf32, #tpu.memory_space<vmem>>, vector<128x1xf32>
    %12 = vector.broadcast %11 : vector<128x1xf32> to vector<128x128xf32>
    %13 = arith.addf %10, %12 : vector<128x128xf32>
    %14 = arith.truncf %13 : vector<128x128xf32> to vector<128x128xbf16>
    %15 = math.tanh %14 : vector<128x128xbf16>
    %16 = arith.extf %15 : vector<128x128xbf16> to vector<128x128xf32>
    %c0_10 = arith.constant 0 : index
    %c0_11 = arith.constant 0 : index
    %17 = vector.load %arg6[%c0_10, %c0_11] : memref<128x1xf32, #tpu.memory_space<vmem>>, vector<128x1xf32>
    %18 = vector.broadcast %17 : vector<128x1xf32> to vector<128x128xf32>
    %19 = arith.mulf %16, %18 : vector<128x128xf32>
    %cst_12 = arith.constant dense<0.000000e+00> : vector<128xf32>
    %20 = vector.multi_reduction <add>, %19, %cst_12 [0] : vector<128x128xf32> to vector<128xf32>
    %21 = vector.shape_cast %20 : vector<128xf32> to vector<1x128xf32>
    %c0_13 = arith.constant 0 : index
    %c0_14 = arith.constant 0 : index
    %22 = vector.load %arg7[%c0_13, %c0_14] : memref<1x1xf32, #tpu.memory_space<vmem>>, vector<1x1xf32>
    %23 = vector.broadcast %22 : vector<1x1xf32> to vector<1x128xf32>
    %24 = arith.addf %21, %23 : vector<1x128xf32>
    %c0_15 = arith.constant 0 : index
    %c0_16 = arith.constant 0 : index
    %25 = vector.load %arg8[%c0_15, %c0_16] : memref<1x128xf32, #tpu.memory_space<vmem>>, vector<1x128xf32>
    tpu.vector_store %arg8[%c0_15, %c0_16], %24 {strides = array<i32>} : memref<1x128xf32, #tpu.memory_space<vmem>>, vector<1x128xf32>,
    return
  }
  func.func @transform_0(%arg0: i32) -> (i32, i32) {
    %c0_i32 = arith.constant 0 : i32
    %c0_i32_0 = arith.constant 0 : i32
    return %arg0, %c0_i32 : i32, i32
  }
  func.func @transform_1(%arg0: i32) -> (i32, i32) {
    %c0_i32 = arith.constant 0 : i32
    %c0_i32_0 = arith.constant 0 : i32
    %c0_i32_1 = arith.constant 0 : i32
    return %c0_i32, %c0_i32_0 : i32, i32
  }
  func.func @transform_2(%arg0: i32) -> (i32, i32) {
    %c0_i32 = arith.constant 0 : i32
    %c0_i32_0 = arith.constant 0 : i32
    %c0_i32_1 = arith.constant 0 : i32
    return %c0_i32, %c0_i32_0 : i32, i32
  }
  func.func @transform_3(%arg0: i32) -> (i32, i32) {
    %c0_i32 = arith.constant 0 : i32
    %c0_i32_0 = arith.constant 0 : i32
    %c0_i32_1 = arith.constant 0 : i32
    return %c0_i32, %c0_i32_0 : i32, i32
  }
  func.func @transform_4(%arg0: i32) -> (i32, i32) {
    %c0_i32 = arith.constant 0 : i32
    %c0_i32_0 = arith.constant 0 : i32
    %c0_i32_1 = arith.constant 0 : i32
    return %c0_i32, %c0_i32_0 : i32, i32
  }
  func.func @transform_5(%arg0: i32) -> (i32, i32) {
    %c0_i32 = arith.constant 0 : i32
    %c0_i32_0 = arith.constant 0 : i32
    %c0_i32_1 = arith.constant 0 : i32
    return %c0_i32, %c0_i32_0 : i32, i32
  }
  func.func @transform_6(%arg0: i32) -> (i32, i32) {
    %c0_i32 = arith.constant 0 : i32
    %c0_i32_0 = arith.constant 0 : i32
    %c0_i32_1 = arith.constant 0 : i32
    return %c0_i32, %c0_i32_0 : i32, i32
  }
  func.func @transform_7(%arg0: i32) -> (i32, i32) {
    %c0_i32 = arith.constant 0 : i32
    %c0_i32_0 = arith.constant 0 : i32
    return %c0_i32, %arg0 : i32, i32
  }
}

</mosaic_0001>

<llo_original>
// kernel: tpu_custom_call.1
$region0: #{tpu_custom_call.1}
  #allocation0 [shape = 'u32[]', space=smem, size = 0x4, offset = 0x4, fixed_abs, tag = 'smem constant byte address 0x4 - core index']
  #allocation1 [shape = 'u32[72,128]{1,0:T(1,128)}', space=vmem, size = 0x9000, scoped, tag = 'internal scratch']
  #allocation2 [shape = 'f32[1,1]{1,0:T(1,128)S(1)}', space=vmem, size = 0x200, scoped, tag = 'scoped memory for tpu_custom_call.1']
  %s0 = inlined_call_operand.vmem [shape: f32[128,32], index: 0, kind: input, shape index: {}]
  %s1 = inlined_call_operand.vmem [shape: bf16[128,32], index: 1, kind: input, shape index: {}]
  %s2 = inlined_call_operand.vmem [shape: f32[128,1], index: 2, kind: input, shape index: {}]
  %s3 = inlined_call_operand.vmem [shape: bf16[128,128], index: 3, kind: input, shape index: {}]
  %s4 = inlined_call_operand.vmem [shape: f32[128,1], index: 4, kind: input, shape index: {}]
  %s5 = inlined_call_operand.vmem [shape: f32[128,1], index: 5, kind: input, shape index: {}]
  %s6 = inlined_call_operand.<no memory space> [shape: f32[1,1], index: 6, kind: input, shape index: {}]
  %s7 = inlined_call_operand.hbm [shape: f32[1,128], index: 7, kind: output, shape index: {}]
  %s8 = sld [smem:[#allocation0]]
  $region38: #{tpu_custom_call.1} parent=0
    _
  %s10 = ssub.s32 1, %s8
  %s11 = scalar_select 0, %s10, %s8
  %v12 = vstv %s6
  %13 = vst [vmem:[#allocation2] sm:$0x1] %v12
  $region1: #{tpu_custom_call.1} parent=0
    #allocation3 [shape = 'u8[512]{0}', space=vmem, size = 0x400, scoped, tag = 'output window, operand 0, single buffered']
    #allocation4 [shape = 's32[1]{0}', space=sflag, size = 0x4, scoped, tag = 'scoped memory for tpu_custom_call.1']
    %14 = vsyncpa [#allocation4], 0
    // Predicated region
    $region2: #{tpu_custom_call.1} parent=1 // pred_check
      _
    $region3: #{tpu_custom_call.1} parent=1 // pred_check_branch
      %16 = sbr.rel (0) target = $region5
    $region4: #{tpu_custom_call.1} parent=1 // pred_region
      _
    $region5: #{tpu_custom_call.1} parent=1 // pred_fallthru
      _
    // Predicated region
    $region6: #{tpu_custom_call.1} parent=1 // pred_check
      _
    $region7: #{tpu_custom_call.1} parent=1 // pred_check_branch
      %18 = sbr.rel (0) target = $region9
    $region8: #{tpu_custom_call.1} parent=1 // pred_region
      _
    $region9: #{tpu_custom_call.1} parent=1 // pred_fallthru
      _
    // Predicated region
    $region10: #{tpu_custom_call.1} parent=1 // pred_check
      _
    $region11: #{tpu_custom_call.1} parent=1 // pred_check_branch
      %20 = sbr.rel (0) target = $region13
    $region12: #{tpu_custom_call.1} parent=1 // pred_region
      _
    $region13: #{tpu_custom_call.1} parent=1 // pred_fallthru
      _
    // Predicated region
    $region14: #{tpu_custom_call.1} parent=1 // pred_check
      _
    $region15: #{tpu_custom_call.1} parent=1 // pred_check_branch
      %22 = sbr.rel (0) target = $region17
    $region16: #{tpu_custom_call.1} parent=1 // pred_region
      _
    $region17: #{tpu_custom_call.1} parent=1 // pred_fallthru
      _
    // Predicated region
    $region18: #{tpu_custom_call.1} parent=1 // pred_check
      _
    $region19: #{tpu_custom_call.1} parent=1 // pred_check_branch
      %24 = sbr.rel (0) target = $region21
    $region20: #{tpu_custom_call.1} parent=1 // pred_region
      _
    $region21: #{tpu_custom_call.1} parent=1 // pred_fallthru
      _
    // Predicated region
    $region22: #{tpu_custom_call.1} parent=1 // pred_check
      _
    $region23: #{tpu_custom_call.1} parent=1 // pred_check_branch
      %26 = sbr.rel (0) target = $region25
    $region24: #{tpu_custom_call.1} parent=1 // pred_region
      _
    $region25: #{tpu_custom_call.1} parent=1 // pred_fallthru
      _
    // Predicated region
    $region26: #{tpu_custom_call.1} parent=1 // pred_check
      _
    $region27: #{tpu_custom_call.1} parent=1 // pred_check_branch
      %28 = sbr.rel (0) target = $region29
    $region28: #{tpu_custom_call.1} parent=1 // pred_region
      _
    $region29: #{tpu_custom_call.1} parent=1 // pred_fallthru
      _
    %v29 = vld [vmem:[%s0] sm:$0xff]
    %v30 = vld [vmem:[%s0 + $0x8] sm:$0xff]
    %v31 = vld [vmem:[%s0 + $0x10] sm:$0xff]
    %v32 = vld [vmem:[%s0 + $0x18] sm:$0xff]
    %v33 = vld [vmem:[%s0 + $0x20] sm:$0xff]
    %v34 = vld [vmem:[%s0 + $0x28] sm:$0xff]
    %v35 = vld [vmem:[%s0 + $0x30] sm:$0xff]
    %v36 = vld [vmem:[%s0 + $0x38] sm:$0xff]
    %v37 = vld [vmem:[%s0 + $0x40] sm:$0xff]
    %v38 = vld [vmem:[%s0 + $0x48] sm:$0xff]
    %v39 = vld [vmem:[%s0 + $0x50] sm:$0xff]
    %v40 = vld [vmem:[%s0 + $0x58] sm:$0xff]
    %v41 = vld [vmem:[%s0 + $0x60] sm:$0xff]
    %v42 = vld [vmem:[%s0 + $0x68] sm:$0xff]
    %v43 = vld [vmem:[%s0 + $0x70] sm:$0xff]
    %v44 = vld [vmem:[%s0 + $0x78] sm:$0xff]
    %v45 = vpack.c.bf16 %v30, %v29
    %v46 = vpack.c.bf16 %v32, %v31
    %v47 = vpack.c.bf16 %v34, %v33
    %v48 = vpack.c.bf16 %v36, %v35
    %v49 = vpack.c.bf16 %v38, %v37
    %v50 = vpack.c.bf16 %v40, %v39
    %v51 = vpack.c.bf16 %v42, %v41
    %v52 = vpack.c.bf16 %v44, %v43
    %v53 = vld [vmem:[%s1] sm:$0xf]
    %v54 = vld [vmem:[%s1 + $0x4] sm:$0xf]
    %v55 = vld [vmem:[%s1 + $0x8] sm:$0xf]
    %v56 = vld [vmem:[%s1 + $0xc] sm:$0xf]
    %v57 = vld [vmem:[%s1 + $0x10] sm:$0xf]
    %v58 = vld [vmem:[%s1 + $0x14] sm:$0xf]
    %v59 = vld [vmem:[%s1 + $0x18] sm:$0xf]
    %v60 = vld [vmem:[%s1 + $0x1c] sm:$0xf]
    %v61 = vld [vmem:[%s1 + $0x20] sm:$0xf]
    %v62 = vld [vmem:[%s1 + $0x24] sm:$0xf]
    %v63 = vld [vmem:[%s1 + $0x28] sm:$0xf]
    %v64 = vld [vmem:[%s1 + $0x2c] sm:$0xf]
    %v65 = vld [vmem:[%s1 + $0x30] sm:$0xf]
    %v66 = vld [vmem:[%s1 + $0x34] sm:$0xf]
    %v67 = vld [vmem:[%s1 + $0x38] sm:$0xf]
    %v68 = vld [vmem:[%s1 + $0x3c] sm:$0xf]
    %v69 = vld [vmem:[%s2] sm:$0xff]
    %v70 = vld [vmem:[%s2 + $0x8] sm:$0xff]
    %v71 = vld [vmem:[%s2 + $0x10] sm:$0xff]
    %v72 = vld [vmem:[%s2 + $0x18] sm:$0xff]
    %v73 = vld [vmem:[%s2 + $0x20] sm:$0xff]
    %v74 = vld [vmem:[%s2 + $0x28] sm:$0xff]
    %v75 = vld [vmem:[%s2 + $0x30] sm:$0xff]
    %v76 = vld [vmem:[%s2 + $0x38] sm:$0xff]
    %v77 = vld [vmem:[%s2 + $0x40] sm:$0xff]
    %v78 = vld [vmem:[%s2 + $0x48] sm:$0xff]
    %v79 = vld [vmem:[%s2 + $0x50] sm:$0xff]
    %v80 = vld [vmem:[%s2 + $0x58] sm:$0xff]
    %v81 = vld [vmem:[%s2 + $0x60] sm:$0xff]
    %v82 = vld [vmem:[%s2 + $0x68] sm:$0xff]
    %v83 = vld [vmem:[%s2 + $0x70] sm:$0xff]
    %v84 = vld [vmem:[%s2 + $0x78] sm:$0xff]
    %86 = vset.pattern.permute.xlu0 0
    %87 = vperm.xlu0 %86, %v69
    %v88 = vpop.permute.xlu0 %87
    %91 = vset.pattern.permute.xlu0 0
    %92 = vperm.xlu0 %91, %v70
    %v93 = vpop.permute.xlu0 %92
    %96 = vset.pattern.permute.xlu0 0
    %97 = vperm.xlu0 %96, %v71
    %v98 = vpop.permute.xlu0 %97
    %101 = vset.pattern.permute.xlu0 0
    %102 = vperm.xlu0 %101, %v72
    %v103 = vpop.permute.xlu0 %102
    %106 = vset.pattern.permute.xlu0 0
    %107 = vperm.xlu0 %106, %v73
    %v108 = vpop.permute.xlu0 %107
    %111 = vset.pattern.permute.xlu0 0
    %112 = vperm.xlu0 %111, %v74
    %v113 = vpop.permute.xlu0 %112
    %116 = vset.pattern.permute.xlu0 0
    %117 = vperm.xlu0 %116, %v75
    %v118 = vpop.permute.xlu0 %117
    %121 = vset.pattern.permute.xlu0 0
    %122 = vperm.xlu0 %121, %v76
    %v123 = vpop.permute.xlu0 %122
    %126 = vset.pattern.permute.xlu0 0
    %127 = vperm.xlu0 %126, %v77
    %v128 = vpop.permute.xlu0 %127
    %131 = vset.pattern.permute.xlu0 0
    %132 = vperm.xlu0 %131, %v78
    %v133 = vpop.permute.xlu0 %132
    %136 = vset.pattern.permute.xlu0 0
    %137 = vperm.xlu0 %136, %v79
    %v138 = vpop.permute.xlu0 %137
    %141 = vset.pattern.permute.xlu0 0
    %142 = vperm.xlu0 %141, %v80
    %v143 = vpop.permute.xlu0 %142
    %146 = vset.pattern.permute.xlu0 0
    %147 = vperm.xlu0 %146, %v81
    %v148 = vpop.permute.xlu0 %147
    %151 = vset.pattern.permute.xlu0 0
    %152 = vperm.xlu0 %151, %v82
    %v153 = vpop.permute.xlu0 %152
    %156 = vset.pattern.permute.xlu0 0
    %157 = vperm.xlu0 %156, %v83
    %v158 = vpop.permute.xlu0 %157
    %161 = vset.pattern.permute.xlu0 0
    %162 = vperm.xlu0 %161, %v84
    %v163 = vpop.permute.xlu0 %162
    %v181 = vunpack.c.l.b16 %v53
    %v182 = vunpack.c.l.b16 %v54
    %v183 = vunpack.c.l.b16 %v55
    %v184 = vunpack.c.l.b16 %v56
    %v185 = vunpack.c.l.b16 %v57
    %v186 = vunpack.c.l.b16 %v58
    %v187 = vunpack.c.l.b16 %v59
    %v188 = vunpack.c.l.b16 %v60
    %v189 = vunpack.c.l.b16 %v61
    %v190 = vunpack.c.l.b16 %v62
    %v191 = vunpack.c.l.b16 %v63
    %v192 = vunpack.c.l.b16 %v64
    %v193 = vunpack.c.l.b16 %v65
    %v194 = vunpack.c.l.b16 %v66
    %v195 = vunpack.c.l.b16 %v67
    %v196 = vunpack.c.l.b16 %v68
    %v197 = vpack.c.b16 %v182, %v181
    %v198 = vpack.c.b16 %v184, %v183
    %v199 = vpack.c.b16 %v186, %v185
    %v200 = vpack.c.b16 %v188, %v187
    %v201 = vpack.c.b16 %v190, %v189
    %v202 = vpack.c.b16 %v192, %v191
    %v203 = vpack.c.b16 %v194, %v193
    %v204 = vpack.c.b16 %v196, %v195
    %vm205 = vcmask 261120
    %v207 = vsel %vm205, %v197, 0
    %v210 = vsel %vm205, %v198, 0
    %v213 = vsel %vm205, %v199, 0
    %v216 = vsel %vm205, %v200, 0
    %v219 = vsel %vm205, %v201, 0
    %v222 = vsel %vm205, %v202, 0
    %v225 = vsel %vm205, %v203, 0
    %v228 = vsel %vm205, %v204, 0
    %v231 = vsel %vm205, %v45, 0
    %v234 = vsel %vm205, %v46, 0
    %v237 = vsel %vm205, %v47, 0
    %v240 = vsel %vm205, %v48, 0
    %v243 = vsel %vm205, %v49, 0
    %v246 = vsel %vm205, %v50, 0
    %v249 = vsel %vm205, %v51, 0
    %v252 = vsel %vm205, %v52, 0
    %254 = vmatpush.bf16.xpose.msra.mxu0 %v252
    %255 = vmatpush.bf16.xpose.msra.mxu0 %v249
    %256 = vmatpush.bf16.xpose.msra.mxu0 %v246
    %257 = vmatpush.bf16.xpose.msra.mxu0 %v243
    %258 = vmatpush.bf16.xpose.msra.mxu0 %v240
    %259 = vmatpush.bf16.xpose.msra.mxu0 %v237
    %260 = vmatpush.bf16.xpose.msra.mxu0 %v234
    %261 = vmatpush.bf16.xpose.msra.mxu0 %v231
    %262 = vmatmul.bf16.gmra.mxu0 %v207
    %v263 = vpop.f32.mrf.mxu0
    %v264 = vadd.f32 %v88, %v263
    %v265 = vpop.f32.mrf.mxu0
    %v266 = vadd.f32 %v93, %v265
    %267 = vmatmul.bf16.gmra.mxu0 %v210
    %v268 = vpop.f32.mrf.mxu0
    %v269 = vadd.f32 %v98, %v268
    %v270 = vpop.f32.mrf.mxu0
    %v271 = vadd.f32 %v103, %v270
    %272 = vmatmul.bf16.gmra.mxu0 %v213
    %v273 = vpop.f32.mrf.mxu0
    %v274 = vadd.f32 %v108, %v273
    %v275 = vpop.f32.mrf.mxu0
    %v276 = vadd.f32 %v113, %v275
    %277 = vmatmul.bf16.gmra.mxu0 %v216
    %v278 = vpop.f32.mrf.mxu0
    %v279 = vadd.f32 %v118, %v278
    %v280 = vpop.f32.mrf.mxu0
    %v281 = vadd.f32 %v123, %v280
    %282 = vmatmul.bf16.gmra.mxu0 %v219
    %v283 = vpop.f32.mrf.mxu0
    %v284 = vadd.f32 %v128, %v283
    %v285 = vpop.f32.mrf.mxu0
    %v286 = vadd.f32 %v133, %v285
    %287 = vmatmul.bf16.gmra.mxu0 %v222
    %v288 = vpop.f32.mrf.mxu0
    %v289 = vadd.f32 %v138, %v288
    %v290 = vpop.f32.mrf.mxu0
    %v291 = vadd.f32 %v143, %v290
    %292 = vmatmul.bf16.gmra.mxu0 %v225
    %v293 = vpop.f32.mrf.mxu0
    %v294 = vadd.f32 %v148, %v293
    %v295 = vpop.f32.mrf.mxu0
    %v296 = vadd.f32 %v153, %v295
    %297 = vmatmul.bf16.gmra.mxu0 %v228
    %v298 = vpop.f32.mrf.mxu0
    %v299 = vadd.f32 %v158, %v298
    %v300 = vpop.f32.mrf.mxu0
    %v301 = vadd.f32 %v163, %v300
    %302 = vdwg.mxu0
    %v303 = vpack.c.bf16 %v266, %v264
    %v304 = vpack.c.bf16 %v271, %v269
    %v305 = vpack.c.bf16 %v276, %v274
    %v306 = vpack.c.bf16 %v281, %v279
    %v307 = vpack.c.bf16 %v286, %v284
    %v308 = vpack.c.bf16 %v291, %v289
    %v309 = vpack.c.bf16 %v296, %v294
    %v310 = vpack.c.bf16 %v301, %v299
    %v311 = vunpack.c.l.bf16 %v303
    %v312 = vunpack.c.h.bf16 %v303
    %v313 = vunpack.c.l.bf16 %v304
    %v314 = vunpack.c.h.bf16 %v304
    %v315 = vunpack.c.l.bf16 %v305
    %v316 = vunpack.c.h.bf16 %v305
    %v317 = vunpack.c.l.bf16 %v306
    %v318 = vunpack.c.h.bf16 %v306
    %v319 = vunpack.c.l.bf16 %v307
    %v320 = vunpack.c.h.bf16 %v307
    %v321 = vunpack.c.l.bf16 %v308
    %v322 = vunpack.c.h.bf16 %v308
    %v323 = vunpack.c.l.bf16 %v309
    %v324 = vunpack.c.h.bf16 %v309
    %v325 = vunpack.c.l.bf16 %v310
    %v326 = vunpack.c.h.bf16 %v310
    %v327 = vtanh.pop %v311
    %v328 = vtanh.pop %v312
    %v329 = vtanh.pop %v313
    %v330 = vtanh.pop %v314
    %v331 = vtanh.pop %v315
    %v332 = vtanh.pop %v316
    %v333 = vtanh.pop %v317
    %v334 = vtanh.pop %v318
    %v335 = vtanh.pop %v319
    %v336 = vtanh.pop %v320
    %v337 = vtanh.pop %v321
    %v338 = vtanh.pop %v322
    %v339 = vtanh.pop %v323
    %v340 = vtanh.pop %v324
    %v341 = vtanh.pop %v325
    %v342 = vtanh.pop %v326
    %v343 = vpack.c.bf16 %v328, %v327
    %v344 = vpack.c.bf16 %v330, %v329
    %v345 = vpack.c.bf16 %v332, %v331
    %v346 = vpack.c.bf16 %v334, %v333
    %v347 = vpack.c.bf16 %v336, %v335
    %v348 = vpack.c.bf16 %v338, %v337
    %v349 = vpack.c.bf16 %v340, %v339
    %v350 = vpack.c.bf16 %v342, %v341
    %v351 = vld [vmem:[%s3] sm:$0xf]
    %v352 = vld [vmem:[%s3 + $0x4] sm:$0xf]
    %v353 = vld [vmem:[%s3 + $0x8] sm:$0xf]
    %v354 = vld [vmem:[%s3 + $0xc] sm:$0xf]
    %v355 = vld [vmem:[%s3 + $0x10] sm:$0xf]
    %v356 = vld [vmem:[%s3 + $0x14] sm:$0xf]
    %v357 = vld [vmem:[%s3 + $0x18] sm:$0xf]
    %v358 = vld [vmem:[%s3 + $0x1c] sm:$0xf]
    %v359 = vld [vmem:[%s3 + $0x20] sm:$0xf]
    %v360 = vld [vmem:[%s3 + $0x24] sm:$0xf]
    %v361 = vld [vmem:[%s3 + $0x28] sm:$0xf]
    %v362 = vld [vmem:[%s3 + $0x2c] sm:$0xf]
    %v363 = vld [vmem:[%s3 + $0x30] sm:$0xf]
    %v364 = vld [vmem:[%s3 + $0x34] sm:$0xf]
    %v365 = vld [vmem:[%s3 + $0x38] sm:$0xf]
    %v366 = vld [vmem:[%s3 + $0x3c] sm:$0xf]
    %v367 = vld [vmem:[%s4] sm:$0xff]
    %v368 = vld [vmem:[%s4 + $0x8] sm:$0xff]
    %v369 = vld [vmem:[%s4 + $0x10] sm:$0xff]
    %v370 = vld [vmem:[%s4 + $0x18] sm:$0xff]
    %v371 = vld [vmem:[%s4 + $0x20] sm:$0xff]
    %v372 = vld [vmem:[%s4 + $0x28] sm:$0xff]
    %v373 = vld [vmem:[%s4 + $0x30] sm:$0xff]
    %v374 = vld [vmem:[%s4 + $0x38] sm:$0xff]
    %v375 = vld [vmem:[%s4 + $0x40] sm:$0xff]
    %v376 = vld [vmem:[%s4 + $0x48] sm:$0xff]
    %v377 = vld [vmem:[%s4 + $0x50] sm:$0xff]
    %v378 = vld [vmem:[%s4 + $0x58] sm:$0xff]
    %v379 = vld [vmem:[%s4 + $0x60] sm:$0xff]
    %v380 = vld [vmem:[%s4 + $0x68] sm:$0xff]
    %v381 = vld [vmem:[%s4 + $0x70] sm:$0xff]
    %v382 = vld [vmem:[%s4 + $0x78] sm:$0xff]
    %384 = vset.pattern.permute.xlu0 0
    %385 = vperm.xlu0 %384, %v367
    %v386 = vpop.permute.xlu0 %385
    %389 = vset.pattern.permute.xlu0 0
    %390 = vperm.xlu0 %389, %v368
    %v391 = vpop.permute.xlu0 %390
    %394 = vset.pattern.permute.xlu0 0
    %395 = vperm.xlu0 %394, %v369
    %v396 = vpop.permute.xlu0 %395
    %399 = vset.pattern.permute.xlu0 0
    %400 = vperm.xlu0 %399, %v370
    %v401 = vpop.permute.xlu0 %400
    %404 = vset.pattern.permute.xlu0 0
    %405 = vperm.xlu0 %404, %v371
    %v406 = vpop.permute.xlu0 %405
    %409 = vset.pattern.permute.xlu0 0
    %410 = vperm.xlu0 %409, %v372
    %v411 = vpop.permute.xlu0 %410
    %414 = vset.pattern.permute.xlu0 0
    %415 = vperm.xlu0 %414, %v373
    %v416 = vpop.permute.xlu0 %415
    %419 = vset.pattern.permute.xlu0 0
    %420 = vperm.xlu0 %419, %v374
    %v421 = vpop.permute.xlu0 %420
    %424 = vset.pattern.permute.xlu0 0
    %425 = vperm.xlu0 %424, %v375
    %v426 = vpop.permute.xlu0 %425
    %429 = vset.pattern.permute.xlu0 0
    %430 = vperm.xlu0 %429, %v376
    %v431 = vpop.permute.xlu0 %430
    %434 = vset.pattern.permute.xlu0 0
    %435 = vperm.xlu0 %434, %v377
    %v436 = vpop.permute.xlu0 %435
    %439 = vset.pattern.permute.xlu0 0
    %440 = vperm.xlu0 %439, %v378
    %v441 = vpop.permute.xlu0 %440
    %444 = vset.pattern.permute.xlu0 0
    %445 = vperm.xlu0 %444, %v379
    %v446 = vpop.permute.xlu0 %445
    %449 = vset.pattern.permute.xlu0 0
    %450 = vperm.xlu0 %449, %v380
    %v451 = vpop.permute.xlu0 %450
    %454 = vset.pattern.permute.xlu0 0
    %455 = vperm.xlu0 %454, %v381
    %v456 = vpop.permute.xlu0 %455
    %459 = vset.pattern.permute.xlu0 0
    %460 = vperm.xlu0 %459, %v382
    %v461 = vpop.permute.xlu0 %460
    %v479 = vunpack.c.l.b16 %v351
    %v480 = vunpack.c.l.b16 %v352
    %v481 = vunpack.c.l.b16 %v353
    %v482 = vunpack.c.l.b16 %v354
    %v483 = vunpack.c.l.b16 %v355
    %v484 = vunpack.c.l.b16 %v356
    %v485 = vunpack.c.l.b16 %v357
    %v486 = vunpack.c.l.b16 %v358
    %v487 = vunpack.c.l.b16 %v359
    %v488 = vunpack.c.l.b16 %v360
    %v489 = vunpack.c.l.b16 %v361
    %v490 = vunpack.c.l.b16 %v362
    %v491 = vunpack.c.l.b16 %v363
    %v492 = vunpack.c.l.b16 %v364
    %v493 = vunpack.c.l.b16 %v365
    %v494 = vunpack.c.l.b16 %v366
    %v495 = vpack.c.b16 %v480, %v479
    %v496 = vpack.c.b16 %v482, %v481
    %v497 = vpack.c.b16 %v484, %v483
    %v498 = vpack.c.b16 %v486, %v485
    %v499 = vpack.c.b16 %v488, %v487
    %v500 = vpack.c.b16 %v490, %v489
    %v501 = vpack.c.b16 %v492, %v491
    %v502 = vpack.c.b16 %v494, %v493
    %511 = vmatpush.bf16.msra.mxu0 %v350
    %512 = vmatpush.bf16.msra.mxu0 %v349
    %513 = vmatpush.bf16.msra.mxu0 %v348
    %514 = vmatpush.bf16.msra.mxu0 %v347
    %515 = vmatpush.bf16.msra.mxu0 %v346
    %516 = vmatpush.bf16.msra.mxu0 %v345
    %517 = vmatpush.bf16.msra.mxu0 %v344
    %518 = vmatpush.bf16.msra.mxu0 %v343
    %519 = vmatmul.bf16.gmra.mxu0 %v495
    %v520 = vpop.f32.mrf.mxu0
    %v521 = vadd.f32 %v386, %v520
    %v522 = vpop.f32.mrf.mxu0
    %v523 = vadd.f32 %v391, %v522
    %524 = vmatmul.bf16.gmra.mxu0 %v496
    %v525 = vpop.f32.mrf.mxu0
    %v526 = vadd.f32 %v396, %v525
    %v527 = vpop.f32.mrf.mxu0
    %v528 = vadd.f32 %v401, %v527
    %529 = vmatmul.bf16.gmra.mxu0 %v497
    %v530 = vpop.f32.mrf.mxu0
    %v531 = vadd.f32 %v406, %v530
    %v532 = vpop.f32.mrf.mxu0
    %v533 = vadd.f32 %v411, %v532
    %534 = vmatmul.bf16.gmra.mxu0 %v498
    %v535 = vpop.f32.mrf.mxu0
    %v536 = vadd.f32 %v416, %v535
    %v537 = vpop.f32.mrf.mxu0
    %v538 = vadd.f32 %v421, %v537
    %539 = vmatmul.bf16.gmra.mxu0 %v499
    %v540 = vpop.f32.mrf.mxu0
    %v541 = vadd.f32 %v426, %v540
    %v542 = vpop.f32.mrf.mxu0
    %v543 = vadd.f32 %v431, %v542
    %544 = vmatmul.bf16.gmra.mxu0 %v500
    %v545 = vpop.f32.mrf.mxu0
    %v546 = vadd.f32 %v436, %v545
    %v547 = vpop.f32.mrf.mxu0
    %v548 = vadd.f32 %v441, %v547
    %549 = vmatmul.bf16.gmra.mxu0 %v501
    %v550 = vpop.f32.mrf.mxu0
    %v551 = vadd.f32 %v446, %v550
    %v552 = vpop.f32.mrf.mxu0
    %v553 = vadd.f32 %v451, %v552
    %554 = vmatmul.bf16.gmra.mxu0 %v502
    %v555 = vpop.f32.mrf.mxu0
    %v556 = vadd.f32 %v456, %v555
    %v557 = vpop.f32.mrf.mxu0
    %v558 = vadd.f32 %v461, %v557
    %559 = vdwg.mxu0
    %v560 = vpack.c.bf16 %v521, %v521
    %v561 = vpack.c.bf16 %v523, %v523
    %v562 = vpack.c.bf16 %v526, %v526
    %v563 = vpack.c.bf16 %v528, %v528
    %v564 = vpack.c.bf16 %v531, %v531
    %v565 = vpack.c.bf16 %v533, %v533
    %v566 = vpack.c.bf16 %v536, %v536
    %v567 = vpack.c.bf16 %v538, %v538
    %v568 = vpack.c.bf16 %v541, %v541
    %v569 = vpack.c.bf16 %v543, %v543
    %v570 = vpack.c.bf16 %v546, %v546
    %v571 = vpack.c.bf16 %v548, %v548
    %v572 = vpack.c.bf16 %v551, %v551
    %v573 = vpack.c.bf16 %v553, %v553
    %v574 = vpack.c.bf16 %v556, %v556
    %v575 = vpack.c.bf16 %v558, %v558
    %v576 = vunpack.c.l.bf16 %v560
    %v577 = vunpack.c.l.bf16 %v561
    %v578 = vunpack.c.l.bf16 %v562
    %v579 = vunpack.c.l.bf16 %v563
    %v580 = vunpack.c.l.bf16 %v564
    %v581 = vunpack.c.l.bf16 %v565
    %v582 = vunpack.c.l.bf16 %v566
    %v583 = vunpack.c.l.bf16 %v567
    %v584 = vunpack.c.l.bf16 %v568
    %v585 = vunpack.c.l.bf16 %v569
    %v586 = vunpack.c.l.bf16 %v570
    %v587 = vunpack.c.l.bf16 %v571
    %v588 = vunpack.c.l.bf16 %v572
    %v589 = vunpack.c.l.bf16 %v573
    %v590 = vunpack.c.l.bf16 %v574
    %v591 = vunpack.c.l.bf16 %v575
    %v592 = vtanh.pop %v576
    %v593 = vtanh.pop %v577
    %v594 = vtanh.pop %v578
    %v595 = vtanh.pop %v579
    %v596 = vtanh.pop %v580
    %v597 = vtanh.pop %v581
    %v598 = vtanh.pop %v582
    %v599 = vtanh.pop %v583
    %v600 = vtanh.pop %v584
    %v601 = vtanh.pop %v585
    %v602 = vtanh.pop %v586
    %v603 = vtanh.pop %v587
    %v604 = vtanh.pop %v588
    %v605 = vtanh.pop %v589
    %v606 = vtanh.pop %v590
    %v607 = vtanh.pop %v591
    %v608 = vpack.c.bf16 %v592, %v592
    %v609 = vpack.c.bf16 %v593, %v593
    %v610 = vpack.c.bf16 %v594, %v594
    %v611 = vpack.c.bf16 %v595, %v595
    %v612 = vpack.c.bf16 %v596, %v596
    %v613 = vpack.c.bf16 %v597, %v597
    %v614 = vpack.c.bf16 %v598, %v598
    %v615 = vpack.c.bf16 %v599, %v599
    %v616 = vpack.c.bf16 %v600, %v600
    %v617 = vpack.c.bf16 %v601, %v601
    %v618 = vpack.c.bf16 %v602, %v602
    %v619 = vpack.c.bf16 %v603, %v603
    %v620 = vpack.c.bf16 %v604, %v604
    %v621 = vpack.c.bf16 %v605, %v605
    %v622 = vpack.c.bf16 %v606, %v606
    %v623 = vpack.c.bf16 %v607, %v607
    %v624 = vunpack.c.l.bf16 %v608
    %v625 = vunpack.c.l.bf16 %v609
    %v626 = vunpack.c.l.bf16 %v610
    %v627 = vunpack.c.l.bf16 %v611
    %v628 = vunpack.c.l.bf16 %v612
    %v629 = vunpack.c.l.bf16 %v613
    %v630 = vunpack.c.l.bf16 %v614
    %v631 = vunpack.c.l.bf16 %v615
    %v632 = vunpack.c.l.bf16 %v616
    %v633 = vunpack.c.l.bf16 %v617
    %v634 = vunpack.c.l.bf16 %v618
    %v635 = vunpack.c.l.bf16 %v619
    %v636 = vunpack.c.l.bf16 %v620
    %v637 = vunpack.c.l.bf16 %v621
    %v638 = vunpack.c.l.bf16 %v622
    %v639 = vunpack.c.l.bf16 %v623
    %v640 = vld [vmem:[%s5] sm:$0xff]
    %v641 = vld [vmem:[%s5 + $0x8] sm:$0xff]
    %v642 = vld [vmem:[%s5 + $0x10] sm:$0xff]
    %v643 = vld [vmem:[%s5 + $0x18] sm:$0xff]
    %v644 = vld [vmem:[%s5 + $0x20] sm:$0xff]
    %v645 = vld [vmem:[%s5 + $0x28] sm:$0xff]
    %v646 = vld [vmem:[%s5 + $0x30] sm:$0xff]
    %v647 = vld [vmem:[%s5 + $0x38] sm:$0xff]
    %v648 = vld [vmem:[%s5 + $0x40] sm:$0xff]
    %v649 = vld [vmem:[%s5 + $0x48] sm:$0xff]
    %v650 = vld [vmem:[%s5 + $0x50] sm:$0xff]
    %v651 = vld [vmem:[%s5 + $0x58] sm:$0xff]
    %v652 = vld [vmem:[%s5 + $0x60] sm:$0xff]
    %v653 = vld [vmem:[%s5 + $0x68] sm:$0xff]
    %v654 = vld [vmem:[%s5 + $0x70] sm:$0xff]
    %v655 = vld [vmem:[%s5 + $0x78] sm:$0xff]
    %657 = vset.pattern.permute.xlu0 0
    %658 = vperm.xlu0 %657, %v640
    %v659 = vpop.permute.xlu0 %658
    %662 = vset.pattern.permute.xlu0 0
    %663 = vperm.xlu0 %662, %v641
    %v664 = vpop.permute.xlu0 %663
    %667 = vset.pattern.permute.xlu0 0
    %668 = vperm.xlu0 %667, %v642
    %v669 = vpop.permute.xlu0 %668
    %672 = vset.pattern.permute.xlu0 0
    %673 = vperm.xlu0 %672, %v643
    %v674 = vpop.permute.xlu0 %673
    %677 = vset.pattern.permute.xlu0 0
    %678 = vperm.xlu0 %677, %v644
    %v679 = vpop.permute.xlu0 %678
    %682 = vset.pattern.permute.xlu0 0
    %683 = vperm.xlu0 %682, %v645
    %v684 = vpop.permute.xlu0 %683
    %687 = vset.pattern.permute.xlu0 0
    %688 = vperm.xlu0 %687, %v646
    %v689 = vpop.permute.xlu0 %688
    %692 = vset.pattern.permute.xlu0 0
    %693 = vperm.xlu0 %692, %v647
    %v694 = vpop.permute.xlu0 %693
    %697 = vset.pattern.permute.xlu0 0
    %698 = vperm.xlu0 %697, %v648
    %v699 = vpop.permute.xlu0 %698
    %702 = vset.pattern.permute.xlu0 0
    %703 = vperm.xlu0 %702, %v649
    %v704 = vpop.permute.xlu0 %703
    %707 = vset.pattern.permute.xlu0 0
    %708 = vperm.xlu0 %707, %v650
    %v709 = vpop.permute.xlu0 %708
    %712 = vset.pattern.permute.xlu0 0
    %713 = vperm.xlu0 %712, %v651
    %v714 = vpop.permute.xlu0 %713
    %717 = vset.pattern.permute.xlu0 0
    %718 = vperm.xlu0 %717, %v652
    %v719 = vpop.permute.xlu0 %718
    %722 = vset.pattern.permute.xlu0 0
    %723 = vperm.xlu0 %722, %v653
    %v724 = vpop.permute.xlu0 %723
    %727 = vset.pattern.permute.xlu0 0
    %728 = vperm.xlu0 %727, %v654
    %v729 = vpop.permute.xlu0 %728
    %732 = vset.pattern.permute.xlu0 0
    %733 = vperm.xlu0 %732, %v655
    %v734 = vpop.permute.xlu0 %733
    %v736 = vmul.f32 %v624, %v659
    %v737 = vmul.f32 %v625, %v664
    %v738 = vmul.f32 %v626, %v669
    %v739 = vmul.f32 %v627, %v674
    %v740 = vmul.f32 %v628, %v679
    %v741 = vmul.f32 %v629, %v684
    %v742 = vmul.f32 %v630, %v689
    %v743 = vmul.f32 %v631, %v694
    %v744 = vmul.f32 %v632, %v699
    %v745 = vmul.f32 %v633, %v704
    %v746 = vmul.f32 %v634, %v709
    %v747 = vmul.f32 %v635, %v714
    %v748 = vmul.f32 %v636, %v719
    %v749 = vmul.f32 %v637, %v724
    %v750 = vmul.f32 %v638, %v729
    %v751 = vmul.f32 %v639, %v734
    %v752 = vadd.f32 %v736, %v737
    %v753 = vadd.f32 %v752, %v738
    %v754 = vadd.f32 %v753, %v739
    %v755 = vadd.f32 %v754, %v740
    %v756 = vadd.f32 %v755, %v741
    %v757 = vadd.f32 %v756, %v742
    %v758 = vadd.f32 %v757, %v743
    %v759 = vadd.f32 %v758, %v744
    %v760 = vadd.f32 %v759, %v745
    %v761 = vadd.f32 %v760, %v746
    %v762 = vadd.f32 %v761, %v747
    %v763 = vadd.f32 %v762, %v748
    %v764 = vadd.f32 %v763, %v749
    %v765 = vadd.f32 %v764, %v750
    %v766 = vadd.f32 %v765, %v751
    %v767 = vrot.slane %v766, 4
    %v768 = vadd.f32 %v766, %v767
    %v769 = vrot.slane %v768, 2
    %v770 = vadd.f32 %v768, %v769
    %v771 = vrot.slane %v770, 1
    %v772 = vadd.f32 %v770, %v771
    %v773 = vld [vmem:[#allocation2] sm:$0x1]
    %775 = vset.pattern.permute.xlu0 0
    %776 = vperm.xlu0 %775, %v773
    %v777 = vpop.permute.xlu0 %776
    %v779 = vperm.slane %v777, 0
    %v780 = vadd.f32 %v772, %v779
    %781 = vst [vmem:[#allocation3] sm:$0x1] %v780
    // Predicated region
    $region30: #{tpu_custom_call.1} parent=1 // pred_check
      _
    $region31: #{tpu_custom_call.1} parent=1 // pred_check_branch
      %783 = sbr.rel (0) target = $region33
    $region32: #{tpu_custom_call.1} parent=1 // pred_region
      %785 = vsyncadd [#allocation4], 0
      %s787 = sshll.u32 [#allocation3], 4
      %s788 = int_to_ptr.vmem [resolvable:$true] %s787
      %s789 = sshll.u32 %s7, 4
      %s790 = int_to_ptr.hbm [resolvable:$true] %s789
      %792 = dma.vmem_to_hbm [thread:$0]  %s788, 16, %s790, [#allocation4]
    $region33: #{tpu_custom_call.1} parent=1 // pred_fallthru
      _
    // Predicated region
    $region34: #{tpu_custom_call.1} parent=1 // pred_check
      _
    $region35: #{tpu_custom_call.1} parent=1 // pred_check_branch
      %794 = sbr.rel (0) target = $region37
    $region36: #{tpu_custom_call.1} parent=1 // pred_region
      %796 = dma.done [#allocation4], 16
    $region37: #{tpu_custom_call.1} parent=1 // pred_fallthru
      _
    %797 = vsyncpa [#allocation4], 1

</llo_original>
